<compile_context>
chip_gen: v7x
topology: tpu7x:2x2x1
jax: 0.10.0
libtpu: 0.0.40
codegen_flags: <defaults>
</compile_context>

<pallas_src>
import functools

import jax
import jax.numpy as jnp
from jax import lax
from jax.experimental import pallas as pl
from jax.experimental.pallas import tpu as pltpu

DIM = 32        # dim[0]
H1 = 60
H2 = 25
OUT = 1


def _mlp_kernel(x_ref, w1_ref, b1_ref, w2_ref, b2_ref, w3_ref, b3_ref, o_ref):
    """Whole 3-layer MLP for one batch tile.

    x_ref : (bb, DIM) f32     w1_ref: (DIM, H1) f32   b1_ref: (1, H1) f32
    w2_ref: (H1, H2)  f32     b2_ref: (1, H2)   f32
    w3_ref: (1, H2)   f32     b3_ref: (1, 1)    f32
    o_ref : (1, bb)   f32  (lane-dense logits, batch on lanes)
    """
    x = x_ref[...]                                                # (bb, DIM)

    # Layer 1: MXU matmul (f32 accumulate), bias + ReLU on the VPU.
    h1 = jnp.dot(x, w1_ref[...], preferred_element_type=jnp.float32)
    h1 = jnp.maximum(h1 + b1_ref[...], 0.0)                       # (bb, H1)

    # Layer 2: same pattern.
    h2 = jnp.dot(h1, w2_ref[...], preferred_element_type=jnp.float32)
    h2 = jnp.maximum(h2 + b2_ref[...], 0.0)                       # (bb, H2)

    # Layer 3 (OUT == 1): contract H2 between the (1, H2) weight row and
    # (bb, H2) activations so the result is a lane-dense (1, bb) row directly
    # from the MXU (same pattern as q @ k.T) — no XLU relayout in the epilogue.
    o = lax.dot_general(w3_ref[...], h2,
                        dimension_numbers=(((1,), (1,)), ((), ())),
                        preferred_element_type=jnp.float32)       # (1, bb)
    o_ref[...] = (o + b3_ref[...]).astype(o_ref.dtype)


def _round_up(n, m):
    return -(-n // m) * m


@functools.partial(jax.jit, static_argnames=("block_b",))
def fully_connected_forward(x, params, *, block_b=4096):
    """x: (B, DIM) float32. Returns logits (B, OUT) float32."""
    w1, b1, w2, b2, w3, b3 = params
    B, D = x.shape

    # Tiny wrapper-side reshapes (a few hundred bytes, done once per call).
    w3_row = w3.reshape(1, H2)       # (H2, OUT=1) -> (1, H2)
    b3_2d = b3.reshape(1, OUT)

    # Tile selection:
    #   * B <= 512: one full-array block (block == array dims, so no (8,128)
    #     divisibility constraint; overhead is negligible at this size).
    #   * B  > 512: multiple of 512 (lane-dense output stores), capped at
    #     block_b, and sized so there are always >= 2 grid steps (both
    #     TensorCores get work on v7x). The last block may be partial; Pallas
    #     truncates its DMAs at the array edge, so no jnp.pad is needed.
    if B <= 512:
        bb = B
    else:
        bb = min(block_b, _round_up(pl.cdiv(B, 2), 512))
    grid = (pl.cdiv(B, bb),)

    def _resident(shape):
        # Same block index every step -> weights stay resident in VMEM.
        return pl.BlockSpec(shape, lambda i: (0, 0))

    flops = 2 * B * (D * H1 + H1 * H2 + H2 * OUT)
    bytes_accessed = 4 * (B * D + B * OUT
                          + D * H1 + H1 * H2 + H2 * OUT + H1 + H2 + OUT)

    out = pl.pallas_call(
        _mlp_kernel,
        out_shape=jax.ShapeDtypeStruct((1, B), jnp.float32),
        grid_spec=pltpu.PrefetchScalarGridSpec(
            num_scalar_prefetch=0,
            grid=grid,
            in_specs=[
                pl.BlockSpec((bb, D), lambda i: (i, 0)),   # x tile (only big DMA)
                _resident((D, H1)),                        # W1
                _resident((1, H1)),                        # b1
                _resident((H1, H2)),                       # W2
                _resident((1, H2)),                        # b2
                _resident((1, H2)),                        # W3 as a row vector
                _resident((1, OUT)),                       # b3
            ],
            out_specs=pl.BlockSpec((1, bb), lambda i: (0, i)),  # lane-dense
        ),
        compiler_params=pltpu.CompilerParams(
            dimension_semantics=("parallel",),       # batch tiles independent
            vmem_limit_bytes=32 * 1024 * 1024,       # ~6 MiB used at bb=4096
        ),
        cost_estimate=pl.CostEstimate(
            flops=flops, transcendentals=0, bytes_accessed=bytes_accessed),
    )(x, w1, b1, w2, b2, w3_row, b3_2d)

    # (1, B) lane-dense row -> (B, 1) logits (tiny reshape, B*4 bytes).
    return out.reshape(B, OUT)


def init_params(key, dim=DIM):
    """Deterministic synthetic init (PyTorch-like uniform ranges); weights
    stored as (in, out), biases as (1, out)."""
    ks = jax.random.split(key, 6)

    def lin(kw, kb, fan_in, fan_out):
        bound = 1.0 / jnp.sqrt(fan_in)
        w = jax.random.uniform(kw, (fan_in, fan_out), jnp.float32, -bound, bound)
        b = jax.random.uniform(kb, (1, fan_out), jnp.float32, -bound, bound)
        return w, b

    w1, b1 = lin(ks[0], ks[1], dim, H1)
    w2, b2 = lin(ks[2], ks[3], H1, H2)
    w3, b3 = lin(ks[4], ks[5], H2, OUT)
    return (w1, b1, w2, b2, w3, b3)


def reference_forward(x, params):
    """Pure f32 reference (matches the PyTorch module numerics)."""
    w1, b1, w2, b2, w3, b3 = params
    h1 = jnp.maximum(x @ w1 + b1, 0.0)
    h2 = jnp.maximum(h1 @ w2 + b2, 0.0)
    return h2 @ w3 + b3.reshape(1, OUT)


if __name__ == "__main__":
    key = jax.random.PRNGKey(0)
    k_p, k_x, k_x2 = jax.random.split(key, 3)
    params = init_params(k_p, DIM)

    # Primary small test (batch=16, dim=32), matching the module's forward.
    B = 16
    x = jax.random.normal(k_x, (B, DIM), jnp.float32)
    batch = {"data": x}
    out = {"logits": fully_connected_forward(batch["data"], params)}
    jax.block_until_ready(out["logits"])
    assert out["logits"].shape == (B, OUT)
    # f32 everywhere; tolerance covers MXU accumulation-order / pass-count
    # differences vs. the XLA f32 reference.
    assert jnp.allclose(out["logits"], reference_forward(x, params),
                        atol=1e-2, rtol=1e-2)

    # Secondary test: multi-step grid (2 tiles of 1024) with a partial tail
    # block (no padding copy) and lane-dense output stores.
    B2 = 1029
    x2 = jax.random.normal(k_x2, (B2, DIM), jnp.float32)
    logits2 = fully_connected_forward(x2, params)
    jax.block_until_ready(logits2)
    assert logits2.shape == (B2, OUT)
    assert jnp.allclose(logits2, reference_forward(x2, params),
                        atol=1e-2, rtol=1e-2)

    print("KERNEL_OK")
</pallas_src>

<mosaic_0001>
module attributes {stable_mosaic.version = 11 : i64} {
  func.func @_mlp_kernel(%arg0: i32, %arg1: memref<16x32xf32, #tpu.memory_space<vmem>>, %arg2: memref<32x60xf32, #tpu.memory_space<vmem>>, %arg3: memref<1x60xf32, #tpu.memory_space<vmem>>, %arg4: memref<60x25xf32, #tpu.memory_space<vmem>>, %arg5: memref<1x25xf32, #tpu.memory_space<vmem>>, %arg6: memref<1x25xf32, #tpu.memory_space<vmem>>, %arg7: memref<1x1xf32, #tpu.memory_space<vmem>>, %arg8: memref<1x16xf32, #tpu.memory_space<vmem>>) attributes {dimension_semantics = [#tpu.dimension_semantics<parallel>], iteration_bounds = array<i64: 1>, scalar_prefetch = 0 : i64, scratch_operands = 0 : i64, tpu.core_type = #tpu.core_type<tc>, window_params = [{transform_indices = @transform_0, window_bounds = array<i64: 16, 32>}, {pipeline_mode = #tpu.pipeline_mode<synchronous>, transform_indices = @transform_1, window_bounds = array<i64: 32, 60>}, {pipeline_mode = #tpu.pipeline_mode<synchronous>, transform_indices = @transform_2, window_bounds = array<i64: 1, 60>}, {pipeline_mode = #tpu.pipeline_mode<synchronous>, transform_indices = @transform_3, window_bounds = array<i64: 60, 25>}, {pipeline_mode = #tpu.pipeline_mode<synchronous>, transform_indices = @transform_4, window_bounds = array<i64: 1, 25>}, {pipeline_mode = #tpu.pipeline_mode<synchronous>, transform_indices = @transform_5, window_bounds = array<i64: 1, 25>}, {pipeline_mode = #tpu.pipeline_mode<synchronous>, transform_indices = @transform_6, window_bounds = array<i64: 1, 1>}, {transform_indices = @transform_7, window_bounds = array<i64: 1, 16>}]} {
    %c0 = arith.constant 0 : index
    %c0_0 = arith.constant 0 : index
    %0 = vector.load %arg1[%c0, %c0_0] : memref<16x32xf32, #tpu.memory_space<vmem>>, vector<16x32xf32>
    %c0_1 = arith.constant 0 : index
    %c0_2 = arith.constant 0 : index
    %1 = vector.load %arg2[%c0_1, %c0_2] : memref<32x60xf32, #tpu.memory_space<vmem>>, vector<32x60xf32>
    %cst = arith.constant dense<0.000000e+00> : vector<16x60xf32>
    %2 = tpu.matmul %0, %1, %cst {dimension_numbers = #tpu.dot_dimension_numbers<[1], [0], [0], [1], [0, 0, 1, 1], [], []>} : vector<16x32xf32>, vector<32x60xf32>, vector<16x60xf32> -> vector<16x60xf32>
    %c0_3 = arith.constant 0 : index
    %c0_4 = arith.constant 0 : index
    %3 = vector.load %arg3[%c0_3, %c0_4] : memref<1x60xf32, #tpu.memory_space<vmem>>, vector<1x60xf32>
    %4 = vector.broadcast %3 : vector<1x60xf32> to vector<16x60xf32>
    %5 = arith.addf %2, %4 : vector<16x60xf32>
    %cst_5 = arith.constant 0.000000e+00 : f32
    %6 = vector.broadcast %cst_5 : f32 to vector<16x60xf32>
    %7 = arith.maximumf %5, %6 : vector<16x60xf32>
    %c0_6 = arith.constant 0 : index
    %c0_7 = arith.constant 0 : index
    %8 = vector.load %arg4[%c0_6, %c0_7] : memref<60x25xf32, #tpu.memory_space<vmem>>, vector<60x25xf32>
    %cst_8 = arith.constant dense<0.000000e+00> : vector<16x25xf32>
    %9 = tpu.matmul %7, %8, %cst_8 {dimension_numbers = #tpu.dot_dimension_numbers<[1], [0], [0], [1], [0, 0, 1, 1], [], []>} : vector<16x60xf32>, vector<60x25xf32>, vector<16x25xf32> -> vector<16x25xf32>
    %c0_9 = arith.constant 0 : index
    %c0_10 = arith.constant 0 : index
    %10 = vector.load %arg5[%c0_9, %c0_10] : memref<1x25xf32, #tpu.memory_space<vmem>>, vector<1x25xf32>
    %11 = vector.broadcast %10 : vector<1x25xf32> to vector<16x25xf32>
    %12 = arith.addf %9, %11 : vector<16x25xf32>
    %cst_11 = arith.constant 0.000000e+00 : f32
    %13 = vector.broadcast %cst_11 : f32 to vector<16x25xf32>
    %14 = arith.maximumf %12, %13 : vector<16x25xf32>
    %c0_12 = arith.constant 0 : index
    %c0_13 = arith.constant 0 : index
    %15 = vector.load %arg6[%c0_12, %c0_13] : memref<1x25xf32, #tpu.memory_space<vmem>>, vector<1x25xf32>
    %cst_14 = arith.constant dense<0.000000e+00> : vector<1x16xf32>
    %16 = tpu.matmul %15, %14, %cst_14 {dimension_numbers = #tpu.dot_dimension_numbers<[1], [1], [0], [0], [0, 0, 1, 0], [], []>} : vector<1x25xf32>, vector<16x25xf32>, vector<1x16xf32> -> vector<1x16xf32>
    %c0_15 = arith.constant 0 : index
    %c0_16 = arith.constant 0 : index
    %17 = vector.load %arg7[%c0_15, %c0_16] : memref<1x1xf32, #tpu.memory_space<vmem>>, vector<1x1xf32>
    %18 = vector.broadcast %17 : vector<1x1xf32> to vector<1x16xf32>
    %19 = arith.addf %16, %18 : vector<1x16xf32>
    %c0_17 = arith.constant 0 : index
    %c0_18 = arith.constant 0 : index
    %20 = vector.load %arg8[%c0_17, %c0_18] : memref<1x16xf32, #tpu.memory_space<vmem>>, vector<1x16xf32>
    tpu.vector_store %arg8[%c0_17, %c0_18], %19 {strides = array<i32>} : memref<1x16xf32, #tpu.memory_space<vmem>>, vector<1x16xf32>,
    return
  }
  func.func @transform_0(%arg0: i32) -> (i32, i32) {
    %c0_i32 = arith.constant 0 : i32
    %c0_i32_0 = arith.constant 0 : i32
    return %arg0, %c0_i32 : i32, i32
  }
  func.func @transform_1(%arg0: i32) -> (i32, i32) {
    %c0_i32 = arith.constant 0 : i32
    %c0_i32_0 = arith.constant 0 : i32
    %c0_i32_1 = arith.constant 0 : i32
    return %c0_i32, %c0_i32_0 : i32, i32
  }
  func.func @transform_2(%arg0: i32) -> (i32, i32) {
    %c0_i32 = arith.constant 0 : i32
    %c0_i32_0 = arith.constant 0 : i32
    %c0_i32_1 = arith.constant 0 : i32
    return %c0_i32, %c0_i32_0 : i32, i32
  }
  func.func @transform_3(%arg0: i32) -> (i32, i32) {
    %c0_i32 = arith.constant 0 : i32
    %c0_i32_0 = arith.constant 0 : i32
    %c0_i32_1 = arith.constant 0 : i32
    return %c0_i32, %c0_i32_0 : i32, i32
  }
  func.func @transform_4(%arg0: i32) -> (i32, i32) {
    %c0_i32 = arith.constant 0 : i32
    %c0_i32_0 = arith.constant 0 : i32
    %c0_i32_1 = arith.constant 0 : i32
    return %c0_i32, %c0_i32_0 : i32, i32
  }
  func.func @transform_5(%arg0: i32) -> (i32, i32) {
    %c0_i32 = arith.constant 0 : i32
    %c0_i32_0 = arith.constant 0 : i32
    %c0_i32_1 = arith.constant 0 : i32
    return %c0_i32, %c0_i32_0 : i32, i32
  }
  func.func @transform_6(%arg0: i32) -> (i32, i32) {
    %c0_i32 = arith.constant 0 : i32
    %c0_i32_0 = arith.constant 0 : i32
    %c0_i32_1 = arith.constant 0 : i32
    return %c0_i32, %c0_i32_0 : i32, i32
  }
  func.func @transform_7(%arg0: i32) -> (i32, i32) {
    %c0_i32 = arith.constant 0 : i32
    %c0_i32_0 = arith.constant 0 : i32
    return %c0_i32, %arg0 : i32, i32
  }
}

</mosaic_0001>

<llo_original>
// kernel: fully_connected_forward.1
$region0: #{fully_connected_forward.1}
  #allocation0 [shape = 'u32[]', space=smem, size = 0x4, offset = 0x4, fixed_abs, tag = 'smem constant byte address 0x4 - core index']
  #allocation1 [shape = 'u32[144,128]{1,0:T(1,128)}', space=vmem, size = 0x12000, scoped, tag = 'internal scratch']
  #allocation2 [shape = 'f32[1,1]{1,0:T(1,128)S(1)}', space=vmem, size = 0x200, scoped, tag = 'scoped memory for fully_connected_forward.1']
  %s0 = inlined_call_operand.vmem [shape: f32[16,32], index: 0, kind: input, shape index: {}]
  %s1 = inlined_call_operand.vmem [shape: f32[32,60], index: 1, kind: input, shape index: {}]
  %s2 = inlined_call_operand.vmem [shape: f32[1,60], index: 2, kind: input, shape index: {}]
  %s3 = inlined_call_operand.vmem [shape: f32[60,25], index: 3, kind: input, shape index: {}]
  %s4 = inlined_call_operand.vmem [shape: f32[1,25], index: 4, kind: input, shape index: {}]
  %s5 = inlined_call_operand.vmem [shape: f32[1,25], index: 5, kind: input, shape index: {}]
  %s6 = inlined_call_operand.<no memory space> [shape: f32[1,1], index: 6, kind: input, shape index: {}]
  %s7 = inlined_call_operand.hbm [shape: f32[1,16], index: 7, kind: output, shape index: {}]
  %s8 = sld [smem:[#allocation0]]
  $region38: #{fully_connected_forward.1} parent=0
    _
  %s10 = ssub.s32 1, %s8
  %s11 = scalar_select 0, %s10, %s8
  %v12 = vstv %s6
  %13 = vst [vmem:[#allocation2] sm:$0x1] %v12
  $region1: #{fully_connected_forward.1} parent=0
    #allocation3 [shape = 'u8[512]{0}', space=vmem, size = 0x400, scoped, tag = 'output window, operand 0, single buffered']
    #allocation4 [shape = 's32[1]{0}', space=sflag, size = 0x4, scoped, tag = 'scoped memory for fully_connected_forward.1']
    %14 = vsyncpa [#allocation4], 0
    // Predicated region
    $region2: #{fully_connected_forward.1} parent=1 // pred_check
      _
    $region3: #{fully_connected_forward.1} parent=1 // pred_check_branch
      %16 = sbr.rel (0) target = $region5
    $region4: #{fully_connected_forward.1} parent=1 // pred_region
      _
    $region5: #{fully_connected_forward.1} parent=1 // pred_fallthru
      _
    // Predicated region
    $region6: #{fully_connected_forward.1} parent=1 // pred_check
      _
    $region7: #{fully_connected_forward.1} parent=1 // pred_check_branch
      %18 = sbr.rel (0) target = $region9
    $region8: #{fully_connected_forward.1} parent=1 // pred_region
      _
    $region9: #{fully_connected_forward.1} parent=1 // pred_fallthru
      _
    // Predicated region
    $region10: #{fully_connected_forward.1} parent=1 // pred_check
      _
    $region11: #{fully_connected_forward.1} parent=1 // pred_check_branch
      %20 = sbr.rel (0) target = $region13
    $region12: #{fully_connected_forward.1} parent=1 // pred_region
      _
    $region13: #{fully_connected_forward.1} parent=1 // pred_fallthru
      _
    // Predicated region
    $region14: #{fully_connected_forward.1} parent=1 // pred_check
      _
    $region15: #{fully_connected_forward.1} parent=1 // pred_check_branch
      %22 = sbr.rel (0) target = $region17
    $region16: #{fully_connected_forward.1} parent=1 // pred_region
      _
    $region17: #{fully_connected_forward.1} parent=1 // pred_fallthru
      _
    // Predicated region
    $region18: #{fully_connected_forward.1} parent=1 // pred_check
      _
    $region19: #{fully_connected_forward.1} parent=1 // pred_check_branch
      %24 = sbr.rel (0) target = $region21
    $region20: #{fully_connected_forward.1} parent=1 // pred_region
      _
    $region21: #{fully_connected_forward.1} parent=1 // pred_fallthru
      _
    // Predicated region
    $region22: #{fully_connected_forward.1} parent=1 // pred_check
      _
    $region23: #{fully_connected_forward.1} parent=1 // pred_check_branch
      %26 = sbr.rel (0) target = $region25
    $region24: #{fully_connected_forward.1} parent=1 // pred_region
      _
    $region25: #{fully_connected_forward.1} parent=1 // pred_fallthru
      _
    // Predicated region
    $region26: #{fully_connected_forward.1} parent=1 // pred_check
      _
    $region27: #{fully_connected_forward.1} parent=1 // pred_check_branch
      %28 = sbr.rel (0) target = $region29
    $region28: #{fully_connected_forward.1} parent=1 // pred_region
      _
    $region29: #{fully_connected_forward.1} parent=1 // pred_fallthru
      _
    %v29 = vld [vmem:[%s0] sm:$0xff]
    %v30 = vld [vmem:[%s0 + $0x8] sm:$0xff]
    %v31 = vld [vmem:[%s1] sm:$0xff]
    %v32 = vld [vmem:[%s1 + $0x8] sm:$0xff]
    %v33 = vld [vmem:[%s1 + $0x10] sm:$0xff]
    %v34 = vld [vmem:[%s1 + $0x18] sm:$0xff]
    %v35 = vld [vmem:[%s2] sm:$0x1]
    %v37 = vlaneseq
    %v38 = vshrl.u32 %v37, 7
    %v39 = vsub.s32 0, %v38
    %v40 = vrot.slane %v35, %v39
    %vm42 = vcmask 261120
    %v44 = vsel %vm42, %v29, 0
    %v47 = vsel %vm42, %v30, 0
    %49 = vmatprep.subr.mxu0 0.0
    %50 = vmatpush1.msra.mxu0 %v31
    %51 = vmatprep.subr.mxu0 0.0
    %52 = vmatpush1.msra.mxu0 %v32
    %53 = vmatprep.subr.mxu0 0.0
    %54 = vmatpush1.msra.mxu0 %v33
    %55 = vmatprep.subr.mxu0 0.0
    %56 = vmatpush1.msra.mxu0 %v34
    %57 = vmatprep.subr.mxu0 0.0
    %58 = vmatpush1.msra.mxu0 0.0
    %59 = vmatprep.subr.mxu0 0.0
    %60 = vmatpush1.msra.mxu0 0.0
    %61 = vmatprep.subr.mxu0 0.0
    %62 = vmatpush1.msra.mxu0 0.0
    %63 = vmatprep.subr.mxu0 0.0
    %64 = vmatpush1.msra.mxu0 0.0
    %65 = vmatprep.subr.mxu0 0.0
    %66 = vmatpush1.msra.mxu0 0.0
    %67 = vmatprep.subr.mxu0 0.0
    %68 = vmatpush1.msra.mxu0 0.0
    %69 = vmatprep.subr.mxu0 0.0
    %70 = vmatpush1.msra.mxu0 0.0
    %71 = vmatprep.subr.mxu0 0.0
    %72 = vmatpush1.msra.mxu0 0.0
    %73 = vmatprep.subr.mxu0 0.0
    %74 = vmatpush1.msra.mxu0 0.0
    %75 = vmatprep.subr.mxu0 0.0
    %76 = vmatpush1.msra.mxu0 0.0
    %77 = vmatprep.subr.mxu0 0.0
    %78 = vmatpush1.msra.mxu0 0.0
    %79 = vmatprep.subr.mxu0 0.0
    %80 = vmatpush1.msra.mxu0 0.0
    %81 = vmatprep.subr.mxu0 0.0
    %82 = vmatpush1.msra.mxu0 0.0
    %83 = vmatprep.subr.mxu0 0.0
    %84 = vmatpush1.msra.mxu0 0.0
    %85 = vmatprep.subr.mxu0 0.0
    %86 = vmatpush1.msra.mxu0 0.0
    %87 = vmatprep.subr.mxu0 0.0
    %88 = vmatpush1.msra.mxu0 0.0
    %89 = vmatprep.subr.mxu0 0.0
    %90 = vmatpush1.msra.mxu0 0.0
    %91 = vmatprep.subr.mxu0 0.0
    %92 = vmatpush1.msra.mxu0 0.0
    %93 = vmatprep.subr.mxu0 0.0
    %94 = vmatpush1.msra.mxu0 0.0
    %95 = vmatprep.subr.mxu0 0.0
    %96 = vmatpush1.msra.mxu0 0.0
    %97 = vmatprep.subr.mxu0 0.0
    %98 = vmatpush1.msra.mxu0 0.0
    %99 = vmatprep.subr.mxu0 0.0
    %100 = vmatpush1.msra.mxu0 0.0
    %101 = vmatprep.subr.mxu0 0.0
    %102 = vmatpush1.msra.mxu0 0.0
    %103 = vmatprep.subr.mxu0 0.0
    %104 = vmatpush1.msra.mxu0 0.0
    %105 = vmatprep.subr.mxu0 0.0
    %106 = vmatpush1.msra.mxu0 0.0
    %107 = vmatprep.subr.mxu0 0.0
    %108 = vmatpush1.msra.mxu0 0.0
    %109 = vmatprep.subr.mxu0 0.0
    %110 = vmatpush1.msra.mxu0 0.0
    %111 = vmatprep.subr.mxu0 0.0
    %112 = vmatpush1.msra.mxu0 0.0
    %113 = vmatprep.mubr.f32.mxu0 0.0
    %114 = vmatmul.mubr.f32.gmra.mrb[0].mxu0 %v44
    %v115 = vpop.f32.mrb[0].mxu0
    %v116 = vadd.f32 %v40, %v115
    %v117 = vpop.f32.mrb[0].mxu0
    %118 = vmatprep.mubr.f32.mxu0 0.0
    %119 = vmatmul.mubr.f32.gmra.mrb[0].mxu0 %v47
    %v120 = vpop.f32.mrb[0].mxu0
    %v121 = vadd.f32 %v40, %v120
    %v122 = vpop.f32.mrb[0].mxu0
    %123 = vdwg.mxu0
    %v124 = vmax.f32 %v116, 0.0
    %v125 = vmax.f32 %v121, 0.0
    %v126 = vld [vmem:[%s3] sm:$0xff]
    %v127 = vld [vmem:[%s3 + $0x8] sm:$0xff]
    %v128 = vld [vmem:[%s3 + $0x10] sm:$0xff]
    %v129 = vld [vmem:[%s3 + $0x18] sm:$0xff]
    %v130 = vld [vmem:[%s3 + $0x20] sm:$0xff]
    %v131 = vld [vmem:[%s3 + $0x28] sm:$0xff]
    %v132 = vld [vmem:[%s3 + $0x30] sm:$0xff]
    %v133 = vld [vmem:[%s3 + $0x38] sm:$0xf]
    %v134 = vld [vmem:[%s4] sm:$0x1]
    %v136 = vlaneseq
    %v137 = vshrl.u32 %v136, 7
    %v138 = vsub.s32 0, %v137
    %v139 = vrot.slane %v134, %v138
    %vm141 = vcmask 490496
    %v143 = vsel %vm141, %v124, 0
    %v146 = vsel %vm141, %v125, 0
    %vm148 = vcmask 1043456
    %v150 = vsel %vm148, %v133, 0
    %152 = vmatprep.subr.mxu0 0.0
    %153 = vmatpush1.msra.mxu0 %v126
    %154 = vmatprep.subr.mxu0 0.0
    %155 = vmatpush1.msra.mxu0 %v127
    %156 = vmatprep.subr.mxu0 0.0
    %157 = vmatpush1.msra.mxu0 %v128
    %158 = vmatprep.subr.mxu0 0.0
    %159 = vmatpush1.msra.mxu0 %v129
    %160 = vmatprep.subr.mxu0 0.0
    %161 = vmatpush1.msra.mxu0 %v130
    %162 = vmatprep.subr.mxu0 0.0
    %163 = vmatpush1.msra.mxu0 %v131
    %164 = vmatprep.subr.mxu0 0.0
    %165 = vmatpush1.msra.mxu0 %v132
    %166 = vmatprep.subr.mxu0 0.0
    %167 = vmatpush1.msra.mxu0 %v150
    %168 = vmatprep.subr.mxu0 0.0
    %169 = vmatpush1.msra.mxu0 0.0
    %170 = vmatprep.subr.mxu0 0.0
    %171 = vmatpush1.msra.mxu0 0.0
    %172 = vmatprep.subr.mxu0 0.0
    %173 = vmatpush1.msra.mxu0 0.0
    %174 = vmatprep.subr.mxu0 0.0
    %175 = vmatpush1.msra.mxu0 0.0
    %176 = vmatprep.subr.mxu0 0.0
    %177 = vmatpush1.msra.mxu0 0.0
    %178 = vmatprep.subr.mxu0 0.0
    %179 = vmatpush1.msra.mxu0 0.0
    %180 = vmatprep.subr.mxu0 0.0
    %181 = vmatpush1.msra.mxu0 0.0
    %182 = vmatprep.subr.mxu0 0.0
    %183 = vmatpush1.msra.mxu0 0.0
    %184 = vmatprep.subr.mxu0 0.0
    %185 = vmatpush1.msra.mxu0 0.0
    %186 = vmatprep.subr.mxu0 0.0
    %187 = vmatpush1.msra.mxu0 0.0
    %188 = vmatprep.subr.mxu0 0.0
    %189 = vmatpush1.msra.mxu0 0.0
    %190 = vmatprep.subr.mxu0 0.0
    %191 = vmatpush1.msra.mxu0 0.0
    %192 = vmatprep.subr.mxu0 0.0
    %193 = vmatpush1.msra.mxu0 0.0
    %194 = vmatprep.subr.mxu0 0.0
    %195 = vmatpush1.msra.mxu0 0.0
    %196 = vmatprep.subr.mxu0 0.0
    %197 = vmatpush1.msra.mxu0 0.0
    %198 = vmatprep.subr.mxu0 0.0
    %199 = vmatpush1.msra.mxu0 0.0
    %200 = vmatprep.subr.mxu0 0.0
    %201 = vmatpush1.msra.mxu0 0.0
    %202 = vmatprep.subr.mxu0 0.0
    %203 = vmatpush1.msra.mxu0 0.0
    %204 = vmatprep.subr.mxu0 0.0
    %205 = vmatpush1.msra.mxu0 0.0
    %206 = vmatprep.subr.mxu0 0.0
    %207 = vmatpush1.msra.mxu0 0.0
    %208 = vmatprep.subr.mxu0 0.0
    %209 = vmatpush1.msra.mxu0 0.0
    %210 = vmatprep.subr.mxu0 0.0
    %211 = vmatpush1.msra.mxu0 0.0
    %212 = vmatprep.subr.mxu0 0.0
    %213 = vmatpush1.msra.mxu0 0.0
    %214 = vmatprep.subr.mxu0 0.0
    %215 = vmatpush1.msra.mxu0 0.0
    %216 = vmatprep.mubr.f32.mxu0 0.0
    %217 = vmatmul.mubr.f32.gmra.mrb[0].mxu0 %v143
    %v218 = vpop.f32.mrb[0].mxu0
    %v219 = vadd.f32 %v139, %v218
    %v220 = vpop.f32.mrb[0].mxu0
    %221 = vmatprep.mubr.f32.mxu0 0.0
    %222 = vmatmul.mubr.f32.gmra.mrb[0].mxu0 %v146
    %v223 = vpop.f32.mrb[0].mxu0
    %v224 = vadd.f32 %v139, %v223
    %v225 = vpop.f32.mrb[0].mxu0
    %226 = vdwg.mxu0
    %v227 = vmax.f32 %v219, 0.0
    %v228 = vmax.f32 %v224, 0.0
    %v229 = vld [vmem:[%s5] sm:$0x1]
    %v230 = vld [vmem:[#allocation2] sm:$0x1]
    %232 = vset.pattern.permute.xlu0 0
    %233 = vperm.xlu0 %232, %v230
    %v234 = vpop.permute.xlu0 %233
    %v236 = vlaneseq
    %v237 = vshrl.u32 %v236, 7
    %v238 = vsub.s32 0, %v237
    %v239 = vrot.slane %v234, %v238
    %vm240 = vcmask 203776
    %v242 = vsel %vm240, %v229, 0
    %v245 = vsel %vm240, %v227, 0
    %v248 = vsel %vm240, %v228, 0
    %250 = vmatprep.subr.mxu0 0.0
    %251 = vmatpush1.xpose.msra.mxu0 %v245
    %252 = vmatprep.subr.mxu0 0.0
    %253 = vmatpush1.xpose.msra.mxu0 %v248
    %254 = vmatprep.subr.mxu0 0.0
    %255 = vmatpush1.xpose.msra.mxu0 0.0
    %256 = vmatprep.subr.mxu0 0.0
    %257 = vmatpush1.xpose.msra.mxu0 0.0
    %258 = vmatprep.subr.mxu0 0.0
    %259 = vmatpush1.xpose.msra.mxu0 0.0
    %260 = vmatprep.subr.mxu0 0.0
    %261 = vmatpush1.xpose.msra.mxu0 0.0
    %262 = vmatprep.subr.mxu0 0.0
    %263 = vmatpush1.xpose.msra.mxu0 0.0
    %264 = vmatprep.subr.mxu0 0.0
    %265 = vmatpush1.xpose.msra.mxu0 0.0
    %266 = vmatprep.subr.mxu0 0.0
    %267 = vmatpush1.xpose.msra.mxu0 0.0
    %268 = vmatprep.subr.mxu0 0.0
    %269 = vmatpush1.xpose.msra.mxu0 0.0
    %270 = vmatprep.subr.mxu0 0.0
    %271 = vmatpush1.xpose.msra.mxu0 0.0
    %272 = vmatprep.subr.mxu0 0.0
    %273 = vmatpush1.xpose.msra.mxu0 0.0
    %274 = vmatprep.subr.mxu0 0.0
    %275 = vmatpush1.xpose.msra.mxu0 0.0
    %276 = vmatprep.subr.mxu0 0.0
    %277 = vmatpush1.xpose.msra.mxu0 0.0
    %278 = vmatprep.subr.mxu0 0.0
    %279 = vmatpush1.xpose.msra.mxu0 0.0
    %280 = vmatprep.subr.mxu0 0.0
    %281 = vmatpush1.xpose.msra.mxu0 0.0
    %282 = vmatprep.subr.mxu0 0.0
    %283 = vmatpush1.xpose.msra.mxu0 0.0
    %284 = vmatprep.subr.mxu0 0.0
    %285 = vmatpush1.xpose.msra.mxu0 0.0
    %286 = vmatprep.subr.mxu0 0.0
    %287 = vmatpush1.xpose.msra.mxu0 0.0
    %288 = vmatprep.subr.mxu0 0.0
    %289 = vmatpush1.xpose.msra.mxu0 0.0
    %290 = vmatprep.subr.mxu0 0.0
    %291 = vmatpush1.xpose.msra.mxu0 0.0
    %292 = vmatprep.subr.mxu0 0.0
    %293 = vmatpush1.xpose.msra.mxu0 0.0
    %294 = vmatprep.subr.mxu0 0.0
    %295 = vmatpush1.xpose.msra.mxu0 0.0
    %296 = vmatprep.subr.mxu0 0.0
    %297 = vmatpush1.xpose.msra.mxu0 0.0
    %298 = vmatprep.subr.mxu0 0.0
    %299 = vmatpush1.xpose.msra.mxu0 0.0
    %300 = vmatprep.subr.mxu0 0.0
    %301 = vmatpush1.xpose.msra.mxu0 0.0
    %302 = vmatprep.subr.mxu0 0.0
    %303 = vmatpush1.xpose.msra.mxu0 0.0
    %304 = vmatprep.subr.mxu0 0.0
    %305 = vmatpush1.xpose.msra.mxu0 0.0
    %306 = vmatprep.subr.mxu0 0.0
    %307 = vmatpush1.xpose.msra.mxu0 0.0
    %308 = vmatprep.subr.mxu0 0.0
    %309 = vmatpush1.xpose.msra.mxu0 0.0
    %310 = vmatprep.subr.mxu0 0.0
    %311 = vmatpush1.xpose.msra.mxu0 0.0
    %312 = vmatprep.subr.mxu0 0.0
    %313 = vmatpush1.xpose.msra.mxu0 0.0
    %314 = vmatprep.mubr.f32.mxu0 0.0
    %315 = vmatmul.mubr.f32.gmra.mrb[0].mxu0 %v242
    %v316 = vpop.f32.mrb[0].mxu0
    %v317 = vadd.f32 %v239, %v316
    %v318 = vpop.f32.mrb[0].mxu0
    %319 = vdwg.mxu0
    %vm320 = vcmask 122880
    %321 = vst.msk [vmem:[#allocation3] sm:$0x1] %vm320, %v317
    // Predicated region
    $region30: #{fully_connected_forward.1} parent=1 // pred_check
      _
    $region31: #{fully_connected_forward.1} parent=1 // pred_check_branch
      %323 = sbr.rel (0) target = $region33
    $region32: #{fully_connected_forward.1} parent=1 // pred_region
      %s325 = ssub.s32 16, 16
      %326 = vsyncadd [#allocation4], %s325
      %s328 = sshll.u32 [#allocation3], 4
      %s329 = int_to_ptr.vmem [resolvable:$true] %s328
      %331 = dma.vmem_to_hbm [thread:$0]  %s329, 16, %s7, [#allocation4]
    $region33: #{fully_connected_forward.1} parent=1 // pred_fallthru
      _
    // Predicated region
    $region34: #{fully_connected_forward.1} parent=1 // pred_check
      _
    $region35: #{fully_connected_forward.1} parent=1 // pred_check_branch
      %333 = sbr.rel (0) target = $region37
    $region36: #{fully_connected_forward.1} parent=1 // pred_region
      %334 = dma.done [#allocation4], 16
    $region37: #{fully_connected_forward.1} parent=1 // pred_fallthru
      _
    %335 = vsyncpa [#allocation4], 1

</llo_original>
